<compile_context>
chip_gen: v6e
topology: v6e:2x2x1
jax: 0.10.0
libtpu: 0.0.40
codegen_flags: <defaults>
</compile_context>

<pallas_src>
import functools

import jax
import jax.numpy as jnp
from jax.experimental import pallas as pl
from jax.experimental.pallas import tpu as pltpu


# ----------------------------- Pallas kernel ----------------------------------------------------
def eca_kernel(w_ref, x_ref, o_ref, *, channels, hw):
    """w_ref: (3,) Conv1d taps in SMEM (scalar prefetch).
    x_ref / o_ref: (spb*C, HW_padded) blocks in VMEM, input dtype (f32 or bf16)."""
    x = x_ref[...].astype(jnp.float32)                        # cast in-kernel only (f32 math on all gens)
    rows = x.shape[0]

    # ---- global average pool per (b, c) row: cross-lane reduction (XLU) -------------------------
    # Padded lanes (if any) are zero, so the sum is exact; divide by the true HW.
    mean = jnp.sum(x, axis=1, keepdims=True) * (1.0 / hw)     # (rows, 1) f32

    # ---- Conv1d(1, 1, k=3, padding=1, bias=False) along the channel (sublane) axis --------------
    # out[c] = w0*mean[c-1] + w1*mean[c] + w2*mean[c+1], zero-padded within each sample.
    prev = pltpu.roll(mean, shift=1, axis=0)                  # mean[c-1]  (circular within block)
    nxt = pltpu.roll(mean, shift=rows - 1, axis=0)            # mean[c+1]  (circular within block)
    ch = jax.lax.broadcasted_iota(jnp.int32, mean.shape, 0) % channels
    prev = jnp.where(ch == 0, 0.0, prev)                      # zero pad at channel 0 of each sample
    nxt = jnp.where(ch == channels - 1, 0.0, nxt)             # zero pad at channel C-1 of each sample
    y = w_ref[0] * prev + w_ref[1] * mean + w_ref[2] * nxt    # (rows, 1)

    # ---- sigmoid gate (EUP) + per-channel rescale ------------------------------------------------
    gate = jax.nn.sigmoid(y)                                  # (rows, 1) f32
    # Re-read x_ref so the tile's live range stays short (review item: avoid vreg spills at
    # large blocks); loads are cheap (3 vld slots/cycle), the store slot is the limiter.
    o_ref[...] = (x_ref[...].astype(jnp.float32) * gate).astype(o_ref.dtype)


# ----------------------------- block sizing -------------------------------------------------------
def _auto_samples_per_block(b, c, hw_p, itemsize, target_bytes):
    """Largest divisor of B whose block (spb*C, hw_p) fits under target_bytes, with 8-aligned
    sublane count (or the whole batch, which is always a legal full-array block)."""
    per_sample = c * hw_p * itemsize
    best = None
    for spb in range(1, b + 1):
        if b % spb:
            continue
        if (spb * c) % 8 != 0 and spb != b:
            continue                                          # (8, 128) block constraint
        if spb * per_sample <= target_bytes:
            best = spb                                        # keep growing while it fits
        else:
            if best is None:
                best = spb                                    # nothing fits: smallest legal block
            break
    return best if best is not None else b


# ----------------------------- wrapper ------------------------------------------------------------
def eca_forward(x_nchw, conv_w, *, samples_per_block=None, target_block_bytes=2 << 20):
    """x_nchw: (B, C, H, W) activation (f32 or bf16); conv_w: (3,) Conv1d weight[0, 0, :]."""
    b, c, h, w = x_nchw.shape
    hw = h * w
    dtype = x_nchw.dtype

    # Lane-dense slab: NCHW keeps HW minor, so this is a pure reshape (no transpose, no copy).
    # No dtype cast here: the kernel DMAs the native dtype and casts in-register.
    x2d = x_nchw.reshape(b * c, hw)

    # Lane-density guard: pad HW to a multiple of 128 so output stores are unmasked vst.
    hw_p = ((hw + 127) // 128) * 128
    if hw_p != hw:
        x2d = jnp.pad(x2d, ((0, 0), (0, hw_p - hw)))

    itemsize = jnp.dtype(dtype).itemsize
    spb = samples_per_block
    if spb is None:
        spb = _auto_samples_per_block(b, c, hw_p, itemsize, target_block_bytes)
    assert b % spb == 0, "samples_per_block must divide the batch"
    rows = spb * c
    assert rows % 8 == 0 or spb == b, "block rows must be 8-aligned (or cover the whole batch)"

    grid = (b // spb,)

    out2d = pl.pallas_call(
        functools.partial(eca_kernel, channels=c, hw=hw),
        out_shape=jax.ShapeDtypeStruct((b * c, hw_p), dtype),
        grid_spec=pltpu.PrefetchScalarGridSpec(
            num_scalar_prefetch=1,                            # conv taps -> SMEM before the grid
            grid=grid,
            in_specs=[pl.BlockSpec((rows, hw_p), lambda i, w_s: (i, 0))],
            out_specs=pl.BlockSpec((rows, hw_p), lambda i, w_s: (i, 0)),
        ),
        compiler_params=pltpu.CompilerParams(
            dimension_semantics=("parallel",),                # shard batch across v7x's 2 TCs
        ),
    )(conv_w.astype(jnp.float32), x2d)

    if hw_p != hw:
        out2d = out2d[:, :hw]
    return out2d.reshape(b, c, h, w)


# ----------------------------- plain-JAX reference -------------------------------------------------
def eca_reference(x, conv_w):
    y = jnp.mean(x, axis=(2, 3))                              # (B, C)
    yp = jnp.pad(y, ((0, 0), (1, 1)))                         # zero padding = 1
    conv = conv_w[0] * yp[:, :-2] + conv_w[1] * yp[:, 1:-1] + conv_w[2] * yp[:, 2:]
    gate = jax.nn.sigmoid(conv)[:, :, None, None]
    return x * gate


# ----------------------------- main -----------------------------------------------------------------
if __name__ == "__main__":
    key = jax.random.PRNGKey(0)
    kx, kw, kx2 = jax.random.split(key, 3)
    conv_w = jax.random.normal(kw, (3,), jnp.float32) * 0.5   # Conv1d(1, 1, 3, bias=False) weight

    # Test 1: small f32 case (auto block sizing -> single grid step at this toy size).
    B, C, H, W = 2, 32, 16, 16
    x = jax.random.normal(kx, (B, C, H, W), jnp.float32)
    out = jax.block_until_ready(eca_forward(x, conv_w))
    ref = eca_reference(x, conv_w)
    assert out.shape == (B, C, H, W)
    assert bool(jnp.isfinite(out).all())
    assert bool(jnp.allclose(out, ref, rtol=1e-4, atol=1e-4))

    # Test 2: bf16 I/O + multi-step pipelined grid (2 samples per block -> grid=(4,)).
    B2, C2 = 8, 32
    x2 = jax.random.normal(kx2, (B2, C2, H, W), jnp.float32).astype(jnp.bfloat16)
    out2 = jax.block_until_ready(eca_forward(x2, conv_w, samples_per_block=2))
    ref2 = eca_reference(x2.astype(jnp.float32), conv_w)
    assert out2.dtype == jnp.bfloat16
    assert bool(jnp.isfinite(out2.astype(jnp.float32)).all())
    assert bool(jnp.allclose(out2.astype(jnp.float32), ref2, rtol=3e-2, atol=3e-2))

    print("KERNEL_OK")
</pallas_src>

<mosaic_0001>
module attributes {stable_mosaic.version = 11 : i64} {
  func.func @eca_kernel(%arg0: i32, %arg1: memref<3xf32, #tpu.memory_space<smem>>, %arg2: memref<64x256xf32, #tpu.memory_space<vmem>>, %arg3: memref<64x256xf32, #tpu.memory_space<vmem>>) attributes {dimension_semantics = [#tpu.dimension_semantics<parallel>], iteration_bounds = array<i64: 1>, scalar_prefetch = 1 : i64, scratch_operands = 0 : i64, tpu.core_type = #tpu.core_type<tc>, window_params = [{transform_indices = @transform_0, window_bounds = array<i64: 64, 256>}, {transform_indices = @transform_1, window_bounds = array<i64: 64, 256>}]} {
    %c0 = arith.constant 0 : index
    %c0_0 = arith.constant 0 : index
    %0 = vector.load %arg2[%c0, %c0_0] : memref<64x256xf32, #tpu.memory_space<vmem>>, vector<64x256xf32>
    %cst = arith.constant dense<0.000000e+00> : vector<64xf32>
    %1 = vector.multi_reduction <add>, %0, %cst [1] : vector<64x256xf32> to vector<64xf32>
    %2 = vector.shape_cast %1 : vector<64xf32> to vector<64x1xf32>
    %cst_1 = arith.constant 3.906250e-03 : f32
    %3 = vector.broadcast %cst_1 : f32 to vector<64x1xf32>
    %4 = arith.mulf %2, %3 : vector<64x1xf32>
    %c1_i32 = arith.constant 1 : i32
    %5 = tpu.dynamic_rotate %4 by %c1_i32 dim 0 : vector<64x1xf32>, i32 -> vector<64x1xf32>
    %c63_i32 = arith.constant 63 : i32
    %6 = tpu.dynamic_rotate %4 by %c63_i32 dim 0 : vector<64x1xf32>, i32 -> vector<64x1xf32>
    %7 = tpu.iota {dimensions = array<i32: 0>} : vector<64x1xi32>
    %c32_i32 = arith.constant 32 : i32
    %c0_i32 = arith.constant 0 : i32
    %8 = arith.cmpi eq, %c32_i32, %c0_i32 : i32
    %c1_i32_2 = arith.constant 1 : i32
    %9 = arith.select %8, %c1_i32_2, %c32_i32 : i32
    %10 = vector.broadcast %9 : i32 to vector<64x1xi32>
    %11 = arith.remsi %7, %10 : vector<64x1xi32>
    %c0_i32_3 = arith.constant 0 : i32
    %12 = vector.broadcast %c0_i32_3 : i32 to vector<64x1xi32>
    %13 = arith.cmpi ne, %11, %12 : vector<64x1xi32>
    %c0_i32_4 = arith.constant 0 : i32
    %14 = vector.broadcast %c0_i32_4 : i32 to vector<64x1xi32>
    %15 = arith.cmpi slt, %11, %14 : vector<64x1xi32>
    %c0_i32_5 = arith.constant 0 : i32
    %16 = arith.cmpi slt, %9, %c0_i32_5 : i32
    %17 = vector.broadcast %16 : i1 to vector<64x1xi1>
    %18 = vector.broadcast %17 : vector<64x1xi1> to vector<64x1xi1>
    %19 = arith.xori %15, %18 : vector<64x1xi1>
    %20 = arith.andi %19, %13 : vector<64x1xi1>
    %21 = vector.broadcast %9 : i32 to vector<64x1xi32>
    %22 = arith.addi %11, %21 : vector<64x1xi32>
    %23 = arith.select %20, %22, %11 : vector<64x1xi1>, vector<64x1xi32>
    %c0_i32_6 = arith.constant 0 : i32
    %24 = vector.broadcast %c0_i32_6 : i32 to vector<64x1xi32>
    %25 = arith.cmpi eq, %23, %24 : vector<64x1xi32>
    %cst_7 = arith.constant 0.000000e+00 : f32
    %26 = vector.broadcast %cst_7 : f32 to vector<64x1xf32>
    %27 = arith.select %25, %26, %5 : vector<64x1xi1>, vector<64x1xf32>
    %c31_i32 = arith.constant 31 : i32
    %28 = vector.broadcast %c31_i32 : i32 to vector<64x1xi32>
    %29 = arith.cmpi eq, %23, %28 : vector<64x1xi32>
    %cst_8 = arith.constant 0.000000e+00 : f32
    %30 = vector.broadcast %cst_8 : f32 to vector<64x1xf32>
    %31 = arith.select %29, %30, %6 : vector<64x1xi1>, vector<64x1xf32>
    %c0_9 = arith.constant 0 : index
    %32 = memref.load %arg1[%c0_9] : memref<3xf32, #tpu.memory_space<smem>>
    %33 = vector.broadcast %32 : f32 to vector<64x1xf32>
    %34 = arith.mulf %33, %27 : vector<64x1xf32>
    %c1 = arith.constant 1 : index
    %35 = memref.load %arg1[%c1] : memref<3xf32, #tpu.memory_space<smem>>
    %36 = vector.broadcast %35 : f32 to vector<64x1xf32>
    %37 = arith.mulf %36, %4 : vector<64x1xf32>
    %38 = arith.addf %34, %37 : vector<64x1xf32>
    %c2 = arith.constant 2 : index
    %39 = memref.load %arg1[%c2] : memref<3xf32, #tpu.memory_space<smem>>
    %40 = vector.broadcast %39 : f32 to vector<64x1xf32>
    %41 = arith.mulf %40, %31 : vector<64x1xf32>
    %42 = arith.addf %38, %41 : vector<64x1xf32>
    %43 = arith.negf %42 : vector<64x1xf32>
    %44 = math.exp %43 : vector<64x1xf32>
    %cst_10 = arith.constant 1.000000e+00 : f32
    %45 = vector.broadcast %cst_10 : f32 to vector<64x1xf32>
    %46 = arith.addf %45, %44 : vector<64x1xf32>
    %47 = arith.divf %45, %46 : vector<64x1xf32>
    %c0_11 = arith.constant 0 : index
    %c0_12 = arith.constant 0 : index
    %48 = vector.load %arg2[%c0_11, %c0_12] : memref<64x256xf32, #tpu.memory_space<vmem>>, vector<64x256xf32>
    %49 = vector.broadcast %47 : vector<64x1xf32> to vector<64x256xf32>
    %50 = arith.mulf %48, %49 : vector<64x256xf32>
    %c0_13 = arith.constant 0 : index
    %c0_14 = arith.constant 0 : index
    %51 = vector.load %arg3[%c0_13, %c0_14] : memref<64x256xf32, #tpu.memory_space<vmem>>, vector<64x256xf32>
    tpu.vector_store %arg3[%c0_13, %c0_14], %50 {strides = array<i32>} : memref<64x256xf32, #tpu.memory_space<vmem>>, vector<64x256xf32>,
    return
  }
  func.func @transform_0(%arg0: i32, %arg1: memref<3xf32, #tpu.memory_space<smem>>) -> (i32, i32) {
    %c0_i32 = arith.constant 0 : i32
    %c0_i32_0 = arith.constant 0 : i32
    return %arg0, %c0_i32 : i32, i32
  }
  func.func @transform_1(%arg0: i32, %arg1: memref<3xf32, #tpu.memory_space<smem>>) -> (i32, i32) {
    %c0_i32 = arith.constant 0 : i32
    %c0_i32_0 = arith.constant 0 : i32
    return %arg0, %c0_i32 : i32, i32
  }
}

</mosaic_0001>

<llo_original>
// kernel: tpu_custom_call.1
$region0: #{tpu_custom_call.1}
  #allocation0 [shape = 'u32[]', space=smem, size = 0x4, offset = 0x4, fixed_abs, tag = 'smem constant byte address 0x4 - core index']
  #allocation1 [shape = 'u32[144,128]{1,0:T(1,128)}', space=vmem, size = 0x12000, scoped, tag = 'internal scratch']
  #allocation2 [shape = 's32[1]{0}', space=sflag, size = 0x4, scoped, tag = 'scoped memory for tpu_custom_call.1']
  #allocation3 [shape = 'u8[512]{0}', space=smem, size = 0x200, scoped, tag = 'prefetched SMEM operand 0']
  %s0 = inlined_call_operand.hbm [shape: f32[3], index: 0, kind: input, shape index: {}]
  %s1 = inlined_call_operand.hbm [shape: f32[64,256], index: 1, kind: input, shape index: {}]
  %s2 = inlined_call_operand.hbm [shape: f32[64,256], index: 2, kind: output, shape index: {}]
  %s3 = sld [smem:[#allocation0]]
  $region18: #{tpu_custom_call.1} parent=0
    _
  %s5 = ssub.s32 1, %s3
  %s6 = scalar_select 0, %s5, %s3
  %8 = dma.hbm_to_smem %s0, 16, [#allocation3], [#allocation2]
  %9 = dma.done [#allocation2], 16
  %10 = sfence
  $region1: #{tpu_custom_call.1} parent=0
    #allocation4 [shape = 'u8[65536]{0}', space=vmem, size = 0x10000, scoped, tag = 'input window, operand 1, single buffered']
    #allocation5 [shape = 's32[1]{0}', space=sflag, size = 0x4, scoped, tag = 'scoped memory for tpu_custom_call.1']
    #allocation6 [shape = 's32[1]{0}', space=sflag, size = 0x4, scoped, tag = 'scoped memory for tpu_custom_call.1']
    #allocation7 [shape = 'u8[65536]{0}', space=vmem, size = 0x10000, scoped, tag = 'output window, operand 0, single buffered']
    %11 = vsyncpa [#allocation5], 0
    %12 = vsyncpa [#allocation6], 0
    // Predicated region
    $region2: #{tpu_custom_call.1} parent=1 // pred_check
      _
    $region3: #{tpu_custom_call.1} parent=1 // pred_check_branch
      %14 = sbr.rel (0) target = $region5
    $region4: #{tpu_custom_call.1} parent=1 // pred_region
      %s16 = ssub.s32 2048, 2048
      %17 = vsyncadd [#allocation5], %s16
      %s18 = sshll.u32 [#allocation4], 4
      %s19 = int_to_ptr.vmem [resolvable:$true] %s18
      %24 = dma.hbm_to_vmem [thread:$0]  %s1, 2048, %s19, [#allocation5], 256, 256, 16
    $region5: #{tpu_custom_call.1} parent=1 // pred_fallthru
      _
    // Predicated region
    $region6: #{tpu_custom_call.1} parent=1 // pred_check
      _
    $region7: #{tpu_custom_call.1} parent=1 // pred_check_branch
      %26 = sbr.rel (0) target = $region9
    $region8: #{tpu_custom_call.1} parent=1 // pred_region
      %27 = dma.done [#allocation5], 2048
    $region9: #{tpu_custom_call.1} parent=1 // pred_fallthru
      _
    %v28 = vld [vmem:[#allocation4] sm:$0xff]
    %v29 = vld [vmem:[#allocation4 + $0x8] sm:$0xff]
    %v30 = vld [vmem:[#allocation4 + $0x10] sm:$0xff]
    %v31 = vld [vmem:[#allocation4 + $0x18] sm:$0xff]
    %v32 = vld [vmem:[#allocation4 + $0x20] sm:$0xff]
    %v33 = vld [vmem:[#allocation4 + $0x28] sm:$0xff]
    %v34 = vld [vmem:[#allocation4 + $0x30] sm:$0xff]
    %v35 = vld [vmem:[#allocation4 + $0x38] sm:$0xff]
    %v36 = vld [vmem:[#allocation4 + $0x40] sm:$0xff]
    %v37 = vld [vmem:[#allocation4 + $0x48] sm:$0xff]
    %v38 = vld [vmem:[#allocation4 + $0x50] sm:$0xff]
    %v39 = vld [vmem:[#allocation4 + $0x58] sm:$0xff]
    %v40 = vld [vmem:[#allocation4 + $0x60] sm:$0xff]
    %v41 = vld [vmem:[#allocation4 + $0x68] sm:$0xff]
    %v42 = vld [vmem:[#allocation4 + $0x70] sm:$0xff]
    %v43 = vld [vmem:[#allocation4 + $0x78] sm:$0xff]
    %v44 = vadd.f32 %v28, %v29
    %45 = vadd.xlane.f32.xlu0 %v44
    %v46 = vpop.xlane.xlu0 %45
    %v47 = vadd.f32 %v30, %v31
    %48 = vadd.xlane.f32.xlu0 %v47
    %v49 = vpop.xlane.xlu0 %48
    %v50 = vadd.f32 %v32, %v33
    %51 = vadd.xlane.f32.xlu0 %v50
    %v52 = vpop.xlane.xlu0 %51
    %v53 = vadd.f32 %v34, %v35
    %54 = vadd.xlane.f32.xlu0 %v53
    %v55 = vpop.xlane.xlu0 %54
    %v56 = vadd.f32 %v36, %v37
    %57 = vadd.xlane.f32.xlu0 %v56
    %v58 = vpop.xlane.xlu0 %57
    %v59 = vadd.f32 %v38, %v39
    %60 = vadd.xlane.f32.xlu0 %v59
    %v61 = vpop.xlane.xlu0 %60
    %v62 = vadd.f32 %v40, %v41
    %63 = vadd.xlane.f32.xlu0 %v62
    %v64 = vpop.xlane.xlu0 %63
    %v65 = vadd.f32 %v42, %v43
    %66 = vadd.xlane.f32.xlu0 %v65
    %v67 = vpop.xlane.xlu0 %66
    %v68 = vmul.f32 %v46, 0.00390625
    %v69 = vmul.f32 %v49, 0.00390625
    %v70 = vmul.f32 %v52, 0.00390625
    %v71 = vmul.f32 %v55, 0.00390625
    %v72 = vmul.f32 %v58, 0.00390625
    %v73 = vmul.f32 %v61, 0.00390625
    %v74 = vmul.f32 %v64, 0.00390625
    %v75 = vmul.f32 %v67, 0.00390625
    %v76 = vrot.slane %v68, 7
    %v77 = vrot.slane %v69, 7
    %v78 = vrot.slane %v70, 7
    %v79 = vrot.slane %v71, 7
    %v80 = vrot.slane %v72, 7
    %v81 = vrot.slane %v73, 7
    %v82 = vrot.slane %v74, 7
    %v83 = vrot.slane %v75, 7
    %v84 = vlaneseq
    %v85 = vshrl.u32 %v84, 7
    %vm86 = vcmp.lt.s32.totalorder %v85, 1
    %v87 = vsel %vm86, %v82, %v83
    %v88 = vsel %vm86, %v81, %v82
    %v89 = vsel %vm86, %v80, %v81
    %v90 = vsel %vm86, %v79, %v80
    %v91 = vsel %vm86, %v78, %v79
    %v92 = vsel %vm86, %v77, %v78
    %v93 = vsel %vm86, %v76, %v77
    %v94 = vsel %vm86, %v83, %v76
    %v95 = vrot.slane %v68, 1
    %v96 = vrot.slane %v69, 1
    %v97 = vrot.slane %v70, 1
    %v98 = vrot.slane %v71, 1
    %v99 = vrot.slane %v72, 1
    %v100 = vrot.slane %v73, 1
    %v101 = vrot.slane %v74, 1
    %v102 = vrot.slane %v75, 1
    %vm103 = vcmp.lt.s32.totalorder %v85, 7
    %v104 = vsel %vm103, %v101, %v102
    %v105 = vsel %vm103, %v100, %v101
    %v106 = vsel %vm103, %v99, %v100
    %v107 = vsel %vm103, %v98, %v99
    %v108 = vsel %vm103, %v97, %v98
    %v109 = vsel %vm103, %v96, %v97
    %v110 = vsel %vm103, %v95, %v96
    %v111 = vsel %vm103, %v102, %v95
    %v112 = vadd.s32 %v85, 8
    %v113 = vadd.s32 %v85, 16
    %v114 = vadd.s32 %v85, 24
    %v115 = vadd.s32 %v85, 32
    %v116 = vadd.s32 %v85, 40
    %v117 = vadd.s32 %v85, 48
    %v118 = vadd.s32 %v85, 56
    %vm119 = vcmp.lt.s32.totalorder %v85, 0
    %v120 = vsub.s32 0, %v85
    %v121 = vsel %vm119, %v120, %v85
    %v122 = vshrl.u32 %v121, 5
    %v123 = vand.u32 %v121, 31
    %v124 = vsub.s32 0, %v123
    %v125 = vsel %vm119, %v124, %v123
    %vm126 = vcmp.lt.s32.totalorder %v112, 0
    %v127 = vsub.s32 0, %v112
    %v128 = vsel %vm126, %v127, %v112
    %v129 = vshrl.u32 %v128, 5
    %v130 = vand.u32 %v128, 31
    %v131 = vsub.s32 0, %v130
    %v132 = vsel %vm126, %v131, %v130
    %vm133 = vcmp.lt.s32.totalorder %v113, 0
    %v134 = vsub.s32 0, %v113
    %v135 = vsel %vm133, %v134, %v113
    %v136 = vshrl.u32 %v135, 5
    %v137 = vand.u32 %v135, 31
    %v138 = vsub.s32 0, %v137
    %v139 = vsel %vm133, %v138, %v137
    %vm140 = vcmp.lt.s32.totalorder %v114, 0
    %v141 = vsub.s32 0, %v114
    %v142 = vsel %vm140, %v141, %v114
    %v143 = vshrl.u32 %v142, 5
    %v144 = vand.u32 %v142, 31
    %v145 = vsub.s32 0, %v144
    %v146 = vsel %vm140, %v145, %v144
    %vm147 = vcmp.lt.s32.totalorder %v115, 0
    %v148 = vsub.s32 0, %v115
    %v149 = vsel %vm147, %v148, %v115
    %v150 = vshrl.u32 %v149, 5
    %v151 = vand.u32 %v149, 31
    %v152 = vsub.s32 0, %v151
    %v153 = vsel %vm147, %v152, %v151
    %vm154 = vcmp.lt.s32.totalorder %v116, 0
    %v155 = vsub.s32 0, %v116
    %v156 = vsel %vm154, %v155, %v116
    %v157 = vshrl.u32 %v156, 5
    %v158 = vand.u32 %v156, 31
    %v159 = vsub.s32 0, %v158
    %v160 = vsel %vm154, %v159, %v158
    %vm161 = vcmp.lt.s32.totalorder %v117, 0
    %v162 = vsub.s32 0, %v117
    %v163 = vsel %vm161, %v162, %v117
    %v164 = vshrl.u32 %v163, 5
    %v165 = vand.u32 %v163, 31
    %v166 = vsub.s32 0, %v165
    %v167 = vsel %vm161, %v166, %v165
    %vm168 = vcmp.lt.s32.totalorder %v118, 0
    %v169 = vsub.s32 0, %v118
    %v170 = vsel %vm168, %v169, %v118
    %v171 = vshrl.u32 %v170, 5
    %v172 = vand.u32 %v170, 31
    %v173 = vsub.s32 0, %v172
    %v174 = vsel %vm168, %v173, %v172
    %vm175 = vcmp.ne.s32.totalorder %v125, 0
    %vm176 = vcmp.ne.s32.totalorder %v132, 0
    %vm177 = vcmp.ne.s32.totalorder %v139, 0
    %vm178 = vcmp.ne.s32.totalorder %v146, 0
    %vm179 = vcmp.ne.s32.totalorder %v153, 0
    %vm180 = vcmp.ne.s32.totalorder %v160, 0
    %vm181 = vcmp.ne.s32.totalorder %v167, 0
    %vm182 = vcmp.ne.s32.totalorder %v174, 0
    %vm183 = vcmp.lt.s32.totalorder %v125, 0
    %vm184 = vcmp.lt.s32.totalorder %v132, 0
    %vm185 = vcmp.lt.s32.totalorder %v139, 0
    %vm186 = vcmp.lt.s32.totalorder %v146, 0
    %vm187 = vcmp.lt.s32.totalorder %v153, 0
    %vm188 = vcmp.lt.s32.totalorder %v160, 0
    %vm189 = vcmp.lt.s32.totalorder %v167, 0
    %vm190 = vcmp.lt.s32.totalorder %v174, 0
    %vm191 = vmand %vm183, %vm175
    %vm192 = vmand %vm184, %vm176
    %vm193 = vmand %vm185, %vm177
    %vm194 = vmand %vm186, %vm178
    %vm195 = vmand %vm187, %vm179
    %vm196 = vmand %vm188, %vm180
    %vm197 = vmand %vm189, %vm181
    %vm198 = vmand %vm190, %vm182
    %v199 = vadd.s32 %v125, 32
    %v200 = vadd.s32 %v132, 32
    %v201 = vadd.s32 %v139, 32
    %v202 = vadd.s32 %v146, 32
    %v203 = vadd.s32 %v153, 32
    %v204 = vadd.s32 %v160, 32
    %v205 = vadd.s32 %v167, 32
    %v206 = vadd.s32 %v174, 32
    %v207 = vsel %vm191, %v199, %v125
    %v208 = vsel %vm192, %v200, %v132
    %v209 = vsel %vm193, %v201, %v139
    %v210 = vsel %vm194, %v202, %v146
    %v211 = vsel %vm195, %v203, %v153
    %v212 = vsel %vm196, %v204, %v160
    %v213 = vsel %vm197, %v205, %v167
    %v214 = vsel %vm198, %v206, %v174
    %vm215 = vcmp.eq.s32.totalorder %v207, 0
    %vm216 = vcmp.eq.s32.totalorder %v208, 0
    %vm217 = vcmp.eq.s32.totalorder %v209, 0
    %vm218 = vcmp.eq.s32.totalorder %v210, 0
    %vm219 = vcmp.eq.s32.totalorder %v211, 0
    %vm220 = vcmp.eq.s32.totalorder %v212, 0
    %vm221 = vcmp.eq.s32.totalorder %v213, 0
    %vm222 = vcmp.eq.s32.totalorder %v214, 0
    %v223 = vsel %vm215, 0.0, %v94
    %v224 = vsel %vm216, 0.0, %v93
    %v225 = vsel %vm217, 0.0, %v92
    %v226 = vsel %vm218, 0.0, %v91
    %v227 = vsel %vm219, 0.0, %v90
    %v228 = vsel %vm220, 0.0, %v89
    %v229 = vsel %vm221, 0.0, %v88
    %v230 = vsel %vm222, 0.0, %v87
    %vm231 = vcmp.eq.s32.totalorder %v207, 31
    %vm232 = vcmp.eq.s32.totalorder %v208, 31
    %vm233 = vcmp.eq.s32.totalorder %v209, 31
    %vm234 = vcmp.eq.s32.totalorder %v210, 31
    %vm235 = vcmp.eq.s32.totalorder %v211, 31
    %vm236 = vcmp.eq.s32.totalorder %v212, 31
    %vm237 = vcmp.eq.s32.totalorder %v213, 31
    %vm238 = vcmp.eq.s32.totalorder %v214, 31
    %v239 = vsel %vm231, 0.0, %v110
    %v240 = vsel %vm232, 0.0, %v109
    %v241 = vsel %vm233, 0.0, %v108
    %v242 = vsel %vm234, 0.0, %v107
    %v243 = vsel %vm235, 0.0, %v106
    %v244 = vsel %vm236, 0.0, %v105
    %v245 = vsel %vm237, 0.0, %v104
    %v246 = vsel %vm238, 0.0, %v111
    %s247 = sld [smem:[#allocation3]]
    %v248 = vstv %s247
    %v249 = vmul.f32 %v248, %v223
    %v250 = vmul.f32 %v248, %v224
    %v251 = vmul.f32 %v248, %v225
    %v252 = vmul.f32 %v248, %v226
    %v253 = vmul.f32 %v248, %v227
    %v254 = vmul.f32 %v248, %v228
    %v255 = vmul.f32 %v248, %v229
    %v256 = vmul.f32 %v248, %v230
    %s257 = sld [smem:[#allocation3 + $0x1]]
    %v258 = vstv %s257
    %v259 = vmul.f32 %v258, %v68
    %v260 = vmul.f32 %v258, %v69
    %v261 = vmul.f32 %v258, %v70
    %v262 = vmul.f32 %v258, %v71
    %v263 = vmul.f32 %v258, %v72
    %v264 = vmul.f32 %v258, %v73
    %v265 = vmul.f32 %v258, %v74
    %v266 = vmul.f32 %v258, %v75
    %v267 = vadd.f32 %v249, %v259
    %v268 = vadd.f32 %v250, %v260
    %v269 = vadd.f32 %v251, %v261
    %v270 = vadd.f32 %v252, %v262
    %v271 = vadd.f32 %v253, %v263
    %v272 = vadd.f32 %v254, %v264
    %v273 = vadd.f32 %v255, %v265
    %v274 = vadd.f32 %v256, %v266
    %s275 = sld [smem:[#allocation3 + $0x2]]
    %v276 = vstv %s275
    %v277 = vmul.f32 %v276, %v239
    %v278 = vmul.f32 %v276, %v240
    %v279 = vmul.f32 %v276, %v241
    %v280 = vmul.f32 %v276, %v242
    %v281 = vmul.f32 %v276, %v243
    %v282 = vmul.f32 %v276, %v244
    %v283 = vmul.f32 %v276, %v245
    %v284 = vmul.f32 %v276, %v246
    %v285 = vadd.f32 %v267, %v277
    %v286 = vadd.f32 %v268, %v278
    %v287 = vadd.f32 %v269, %v279
    %v288 = vadd.f32 %v270, %v280
    %v289 = vadd.f32 %v271, %v281
    %v290 = vadd.f32 %v272, %v282
    %v291 = vadd.f32 %v273, %v283
    %v292 = vadd.f32 %v274, %v284
    %v293 = vxor.u32 %v285, 2147483648
    %v294 = vxor.u32 %v286, 2147483648
    %v295 = vxor.u32 %v287, 2147483648
    %v296 = vxor.u32 %v288, 2147483648
    %v297 = vxor.u32 %v289, 2147483648
    %v298 = vxor.u32 %v290, 2147483648
    %v299 = vxor.u32 %v291, 2147483648
    %v300 = vxor.u32 %v292, 2147483648
    %v301 = vmul.f32 %v293, 1.442695
    %v302 = vpow.pop %v301
    %v303 = vmul.f32 %v294, 1.442695
    %v304 = vpow.pop %v303
    %v305 = vmul.f32 %v295, 1.442695
    %v306 = vpow.pop %v305
    %v307 = vmul.f32 %v296, 1.442695
    %v308 = vpow.pop %v307
    %v309 = vmul.f32 %v297, 1.442695
    %v310 = vpow.pop %v309
    %v311 = vmul.f32 %v298, 1.442695
    %v312 = vpow.pop %v311
    %v313 = vmul.f32 %v299, 1.442695
    %v314 = vpow.pop %v313
    %v315 = vmul.f32 %v300, 1.442695
    %v316 = vpow.pop %v315
    %v317 = vadd.f32 %v302, 1.0
    %v318 = vadd.f32 %v304, 1.0
    %v319 = vadd.f32 %v306, 1.0
    %v320 = vadd.f32 %v308, 1.0
    %v321 = vadd.f32 %v310, 1.0
    %v322 = vadd.f32 %v312, 1.0
    %v323 = vadd.f32 %v314, 1.0
    %v324 = vadd.f32 %v316, 1.0
    %v325 = vrcp.pop %v317
    %v326 = vmul.f32 1.0, %v325
    %v327 = vrcp.pop %v318
    %v328 = vmul.f32 1.0, %v327
    %v329 = vrcp.pop %v319
    %v330 = vmul.f32 1.0, %v329
    %v331 = vrcp.pop %v320
    %v332 = vmul.f32 1.0, %v331
    %v333 = vrcp.pop %v321
    %v334 = vmul.f32 1.0, %v333
    %v335 = vrcp.pop %v322
    %v336 = vmul.f32 1.0, %v335
    %v337 = vrcp.pop %v323
    %v338 = vmul.f32 1.0, %v337
    %v339 = vrcp.pop %v324
    %v340 = vmul.f32 1.0, %v339
    %342 = vset.pattern.permute.xlu0 0
    %343 = vperm.xlu0 %342, %v326
    %v344 = vpop.permute.xlu0 %343
    %347 = vset.pattern.permute.xlu0 0
    %348 = vperm.xlu0 %347, %v328
    %v349 = vpop.permute.xlu0 %348
    %352 = vset.pattern.permute.xlu0 0
    %353 = vperm.xlu0 %352, %v330
    %v354 = vpop.permute.xlu0 %353
    %357 = vset.pattern.permute.xlu0 0
    %358 = vperm.xlu0 %357, %v332
    %v359 = vpop.permute.xlu0 %358
    %362 = vset.pattern.permute.xlu0 0
    %363 = vperm.xlu0 %362, %v334
    %v364 = vpop.permute.xlu0 %363
    %367 = vset.pattern.permute.xlu0 0
    %368 = vperm.xlu0 %367, %v336
    %v369 = vpop.permute.xlu0 %368
    %372 = vset.pattern.permute.xlu0 0
    %373 = vperm.xlu0 %372, %v338
    %v374 = vpop.permute.xlu0 %373
    %377 = vset.pattern.permute.xlu0 0
    %378 = vperm.xlu0 %377, %v340
    %v379 = vpop.permute.xlu0 %378
    %v381 = vmul.f32 %v28, %v344
    %v382 = vmul.f32 %v29, %v344
    %v383 = vmul.f32 %v30, %v349
    %v384 = vmul.f32 %v31, %v349
    %v385 = vmul.f32 %v32, %v354
    %v386 = vmul.f32 %v33, %v354
    %v387 = vmul.f32 %v34, %v359
    %v388 = vmul.f32 %v35, %v359
    %v389 = vmul.f32 %v36, %v364
    %v390 = vmul.f32 %v37, %v364
    %v391 = vmul.f32 %v38, %v369
    %v392 = vmul.f32 %v39, %v369
    %v393 = vmul.f32 %v40, %v374
    %v394 = vmul.f32 %v41, %v374
    %v395 = vmul.f32 %v42, %v379
    %v396 = vmul.f32 %v43, %v379
    %397 = vst [vmem:[#allocation7] sm:$0xff] %v381
    %398 = vst [vmem:[#allocation7 + $0x8] sm:$0xff] %v382
    %399 = vst [vmem:[#allocation7 + $0x10] sm:$0xff] %v383
    %400 = vst [vmem:[#allocation7 + $0x18] sm:$0xff] %v384
    %401 = vst [vmem:[#allocation7 + $0x20] sm:$0xff] %v385
    %402 = vst [vmem:[#allocation7 + $0x28] sm:$0xff] %v386
    %403 = vst [vmem:[#allocation7 + $0x30] sm:$0xff] %v387
    %404 = vst [vmem:[#allocation7 + $0x38] sm:$0xff] %v388
    %405 = vst [vmem:[#allocation7 + $0x40] sm:$0xff] %v389
    %406 = vst [vmem:[#allocation7 + $0x48] sm:$0xff] %v390
    %407 = vst [vmem:[#allocation7 + $0x50] sm:$0xff] %v391
    %408 = vst [vmem:[#allocation7 + $0x58] sm:$0xff] %v392
    %409 = vst [vmem:[#allocation7 + $0x60] sm:$0xff] %v393
    %410 = vst [vmem:[#allocation7 + $0x68] sm:$0xff] %v394
    %411 = vst [vmem:[#allocation7 + $0x70] sm:$0xff] %v395
    %412 = vst [vmem:[#allocation7 + $0x78] sm:$0xff] %v396
    // Predicated region
    $region10: #{tpu_custom_call.1} parent=1 // pred_check
      _
    $region11: #{tpu_custom_call.1} parent=1 // pred_check_branch
      %414 = sbr.rel (0) target = $region13
    $region12: #{tpu_custom_call.1} parent=1 // pred_region
      %s416 = ssub.s32 2048, 2048
      %417 = vsyncadd [#allocation6], %s416
      %s418 = sshll.u32 [#allocation7], 4
      %s419 = int_to_ptr.vmem [resolvable:$true] %s418
      %424 = dma.vmem_to_hbm [thread:$0]  %s419, 2048, %s2, [#allocation6], 256, 256, 16
    $region13: #{tpu_custom_call.1} parent=1 // pred_fallthru
      _
    // Predicated region
    $region14: #{tpu_custom_call.1} parent=1 // pred_check
      _
    $region15: #{tpu_custom_call.1} parent=1 // pred_check_branch
      %426 = sbr.rel (0) target = $region17
    $region16: #{tpu_custom_call.1} parent=1 // pred_region
      %427 = dma.done [#allocation6], 2048
    $region17: #{tpu_custom_call.1} parent=1 // pred_fallthru
      _
    %428 = vsyncpa [#allocation5], 1
    %429 = vsyncpa [#allocation6], 1

</llo_original>
